<compile_context>
chip_gen: v7x
topology: tpu7x:2x2x1
jax: 0.10.0
libtpu: 0.0.40
codegen_flags: <defaults>
</compile_context>

<pallas_src>
import functools

import jax
import jax.numpy as jnp
from jax import lax
from jax.experimental import pallas as pl
from jax.experimental.pallas import tpu as pltpu

EPS = 1e-5  # PyG default eps for BatchNorm / LayerNorm / GraphNorm / DiffGroupNorm

_VMEM_LIMIT = 32 * 1024 * 1024   # explicit scoped-VMEM ceiling; safe on v5e/v6e/v7x
_BLOCK_BYTES = 2 * 1024 * 1024   # ~2 MiB x-blocks: past the HBM-roofline knee,
                                 # 2x(in)+2x(out) double buffers stay << _VMEM_LIMIT
_FUSED_BYTES = 2 * 1024 * 1024   # below this, keep x VMEM-resident in one fused pass
_MAX_ROWS = 8192


def _cparams(*semantics):
    return pltpu.CompilerParams(dimension_semantics=semantics,
                                vmem_limit_bytes=_VMEM_LIMIT)


_NOGRID = pltpu.CompilerParams(vmem_limit_bytes=_VMEM_LIMIT)


# ----------------------------------------------------------------------------
# Tiling helpers
# ----------------------------------------------------------------------------
def _choose_tm(n, c, itemsize, tile_rows=None):
    """Rows per block: multiple of 16, ~_BLOCK_BYTES of x, never larger than N."""
    if tile_rows is not None:
        tm = int(tile_rows)
    else:
        tm = _BLOCK_BYTES // max(1, c * itemsize)
    tm = max(16, (tm // 16) * 16)
    n16 = ((n + 15) // 16) * 16
    return max(16, min(tm, n16, _MAX_ROWS))


def _row_block(tm, c):
    # x / out / bid tiles marching down the node axis.
    return pl.BlockSpec((tm, c), lambda i: (i, 0))


def _const_block(shape):
    # Small parameter / statistics arrays: same (tiny) block every grid step.
    z = (0,) * len(shape)
    return pl.BlockSpec(shape, lambda i, _z=z: _z)


# ----------------------------------------------------------------------------
# LayerNorm (mode='node')
# ----------------------------------------------------------------------------
def _layer_norm_kernel(x_ref, w_ref, b_ref, o_ref):
    x = x_ref[...].astype(jnp.float32)                       # [TM, C]
    mean = jnp.mean(x, axis=-1, keepdims=True)
    xc = x - mean
    var = jnp.mean(xc * xc, axis=-1, keepdims=True)          # biased variance
    o_ref[...] = (xc * lax.rsqrt(var + EPS) * w_ref[...] + b_ref[...]).astype(o_ref.dtype)


# ----------------------------------------------------------------------------
# BatchNorm (training-mode batch statistics)
# ----------------------------------------------------------------------------
def _batch_stats_kernel(x_ref, stats_ref, *, n_total, block_rows):
    # Pass 1: accumulate per-channel sum / sum-of-squares directly in the
    # VMEM-resident output block; rows >= n_total are masked out.
    i = pl.program_id(0)

    @pl.when(i == 0)
    def _():
        stats_ref[...] = jnp.zeros_like(stats_ref)

    x = x_ref[...].astype(jnp.float32)                       # [TM, C]
    rows = lax.broadcasted_iota(jnp.int32, (x.shape[0], 1), 0) + i * block_rows
    x = jnp.where(rows < n_total, x, 0.0)
    stats_ref[0:1, :] += jnp.sum(x, axis=0, keepdims=True)
    stats_ref[1:2, :] += jnp.sum(x * x, axis=0, keepdims=True)

    @pl.when(i == pl.num_programs(0) - 1)
    def _():
        inv_n = 1.0 / n_total
        mean = stats_ref[0:1, :] * inv_n
        # TODO(synk): E[x^2]-mean^2 can cancel for large-mean channels; a shifted
        # accumulation would be more robust (clamped to 0 here).
        var = jnp.maximum(stats_ref[1:2, :] * inv_n - mean * mean, 0.0)
        stats_ref[0:1, :] = mean
        stats_ref[1:2, :] = lax.rsqrt(var + EPS)


def _batch_apply_kernel(x_ref, stats_ref, w_ref, b_ref, o_ref):
    x = x_ref[...].astype(jnp.float32)
    o_ref[...] = ((x - stats_ref[0:1, :]) * stats_ref[1:2, :] * w_ref[...]
                  + b_ref[...]).astype(o_ref.dtype)


def _batch_fused_kernel(x_ref, w_ref, b_ref, o_ref):
    # Whole array VMEM-resident: single pass, one HBM read of x.
    x = x_ref[...].astype(jnp.float32)
    mean = jnp.mean(x, axis=0, keepdims=True)
    xc = x - mean
    var = jnp.mean(xc * xc, axis=0, keepdims=True)
    o_ref[...] = (xc * lax.rsqrt(var + EPS) * w_ref[...] + b_ref[...]).astype(o_ref.dtype)


# ----------------------------------------------------------------------------
# DiffGroupNorm
# ----------------------------------------------------------------------------
_DN_NODE = (((0,), (0,)), ((), ()))   # dot_general: contract the node axis


def _group_stats_kernel(x_ref, wT_ref, inv_ref, off_ref, sum_sc, sq_sc, *,
                        n_total, block_rows):
    # mean_gc = (s^T @ x)/N ; E[g^2]_gc = ((s*s)^T @ (x*x))/N  (never [N,G,C]).
    # Note: the small [TM,G] operand carries the transposed role, not the x tile.
    i = pl.program_id(0)

    @pl.when(i == 0)
    def _():
        sum_sc[...] = jnp.zeros_like(sum_sc)
        sq_sc[...] = jnp.zeros_like(sq_sc)

    x = x_ref[...].astype(jnp.float32)                       # [TM, C]
    rows = lax.broadcasted_iota(jnp.int32, (x.shape[0], 1), 0) + i * block_rows
    x = jnp.where(rows < n_total, x, 0.0)                    # masked rows contribute 0
    logits = jnp.dot(x, wT_ref[...].astype(jnp.float32),
                     preferred_element_type=jnp.float32)     # [TM, G]
    s = jax.nn.softmax(logits, axis=-1)
    sum_sc[...] += lax.dot_general(s, x, _DN_NODE,
                                   preferred_element_type=jnp.float32)       # [G, C]
    sq_sc[...] += lax.dot_general(s * s, x * x, _DN_NODE,
                                  preferred_element_type=jnp.float32)        # [G, C]

    @pl.when(i == pl.num_programs(0) - 1)
    def _():
        inv_n = 1.0 / n_total
        mean = sum_sc[...] * inv_n
        var = jnp.maximum(sq_sc[...] * inv_n - mean * mean, 0.0)
        inv = lax.rsqrt(var + EPS)
        inv_ref[...] = inv                                   # [G, C]
        off_ref[...] = jnp.sum(mean * inv, axis=0, keepdims=True)  # [1, C]


def _group_apply_kernel(x_ref, wT_ref, inv_ref, off_ref, o_ref, *, lamda):
    # y = x + lamda * (x * (s @ inv) - sum_g(mean_gc * inv_gc))
    x = x_ref[...].astype(jnp.float32)                       # [TM, C]
    logits = jnp.dot(x, wT_ref[...].astype(jnp.float32),
                     preferred_element_type=jnp.float32)
    s = jax.nn.softmax(logits, axis=-1)
    scale = jnp.dot(s, inv_ref[...], preferred_element_type=jnp.float32)  # [TM, C]
    o_ref[...] = (x + lamda * (x * scale - off_ref[...])).astype(o_ref.dtype)


def _group_fused_kernel(x_ref, wT_ref, o_ref, *, lamda):
    x = x_ref[...].astype(jnp.float32)                       # [N, C]
    n = x.shape[0]
    logits = jnp.dot(x, wT_ref[...].astype(jnp.float32),
                     preferred_element_type=jnp.float32)
    s = jax.nn.softmax(logits, axis=-1)
    inv_n = 1.0 / n
    mean = lax.dot_general(s, x, _DN_NODE, preferred_element_type=jnp.float32) * inv_n
    ex2 = lax.dot_general(s * s, x * x, _DN_NODE,
                          preferred_element_type=jnp.float32) * inv_n
    var = jnp.maximum(ex2 - mean * mean, 0.0)
    inv = lax.rsqrt(var + EPS)
    scale = jnp.dot(s, inv, preferred_element_type=jnp.float32)
    off = jnp.sum(mean * inv, axis=0, keepdims=True)
    o_ref[...] = (x + lamda * (x * scale - off)).astype(o_ref.dtype)


# ----------------------------------------------------------------------------
# GraphNorm
# ----------------------------------------------------------------------------
def _graph_stats_kernel(x_ref, bid_ref, sum_ref, sq_ref, cnt_ref, *,
                        num_graphs, n_total, block_rows):
    # Per-graph raw sums / sums-of-squares / counts via one-hot matmuls.
    # Accumulates directly into the VMEM-resident output blocks.
    i = pl.program_id(0)

    @pl.when(i == 0)
    def _():
        sum_ref[...] = jnp.zeros_like(sum_ref)
        sq_ref[...] = jnp.zeros_like(sq_ref)
        cnt_ref[...] = jnp.zeros_like(cnt_ref)

    x = x_ref[...].astype(jnp.float32)                       # [TM, C]
    bid = bid_ref[...]                                       # [TM, 1] int32
    tm = x.shape[0]
    rows = lax.broadcasted_iota(jnp.int32, (tm, 1), 0) + i * block_rows
    valid = rows < n_total                                   # [TM, 1]
    x = jnp.where(valid, x, 0.0)
    gids = lax.broadcasted_iota(jnp.int32, (tm, num_graphs), 1)
    onehot = jnp.logical_and(bid == gids, valid).astype(jnp.float32)   # [TM, B]

    sum_ref[...] += lax.dot_general(onehot, x, _DN_NODE,
                                    preferred_element_type=jnp.float32)      # [B, C]
    sq_ref[...] += lax.dot_general(onehot, x * x, _DN_NODE,
                                   preferred_element_type=jnp.float32)       # [B, C]
    cnt_ref[...] += jnp.sum(onehot, axis=0, keepdims=True)                   # [1, B]


def _graph_apply_kernel(x_ref, bid_ref, sum_ref, sq_ref, cnt_ref, ms_ref,
                        w_ref, b_ref, o_ref, *, num_graphs):
    # Gather per-graph stats back per node (MXU), normalize per node.
    x = x_ref[...].astype(jnp.float32)                       # [TM, C]
    bid = bid_ref[...]                                       # [TM, 1]
    tm = x.shape[0]
    gids = lax.broadcasted_iota(jnp.int32, (tm, num_graphs), 1)
    onehot = (bid == gids).astype(jnp.float32)               # [TM, B]

    # counts per node via a lane reduction (no 1-lane matmul / transpose)
    cnt_pn = jnp.maximum(jnp.sum(onehot * cnt_ref[...], axis=1, keepdims=True), 1.0)
    mean_pn = jnp.dot(onehot, sum_ref[...], preferred_element_type=jnp.float32) / cnt_pn
    ex2_pn = jnp.dot(onehot, sq_ref[...], preferred_element_type=jnp.float32) / cnt_pn
    ms = ms_ref[...]
    out = x - mean_pn * ms
    # var over nodes of (x - mean*ms)^2 == E[x^2] - mean^2 * ms * (2 - ms)
    var_pn = jnp.maximum(ex2_pn - mean_pn * mean_pn * ms * (2.0 - ms), 0.0)
    o_ref[...] = (w_ref[...] * out * lax.rsqrt(var_pn + EPS) + b_ref[...]).astype(o_ref.dtype)


def _graph_fused_kernel(x_ref, bid_ref, ms_ref, w_ref, b_ref, o_ref, *, num_graphs):
    # Whole array VMEM-resident: exact (non-cancelling) variance formulation.
    x = x_ref[...].astype(jnp.float32)                       # [N, C]
    bid = bid_ref[...]                                       # [N, 1]
    n = x.shape[0]
    gids = lax.broadcasted_iota(jnp.int32, (n, num_graphs), 1)
    onehot = (bid == gids).astype(jnp.float32)               # [N, B]

    sums = lax.dot_general(onehot, x, _DN_NODE, preferred_element_type=jnp.float32)
    cnt = jnp.sum(onehot, axis=0, keepdims=True)             # [1, B]
    cnt_pn = jnp.maximum(jnp.sum(onehot * cnt, axis=1, keepdims=True), 1.0)  # [N, 1]
    mean_pn = jnp.dot(onehot, sums, preferred_element_type=jnp.float32) / cnt_pn
    out = x - mean_pn * ms_ref[...]
    sqs = lax.dot_general(onehot, out * out, _DN_NODE, preferred_element_type=jnp.float32)
    var_pn = jnp.dot(onehot, sqs, preferred_element_type=jnp.float32) / cnt_pn
    o_ref[...] = (w_ref[...] * out * lax.rsqrt(var_pn + EPS) + b_ref[...]).astype(o_ref.dtype)


# ----------------------------------------------------------------------------
# NormLayer wrapper (parameter setup / tiling / dispatch = glue, compute = Pallas)
# ----------------------------------------------------------------------------
class NormLayer:
    def __init__(self, norm, in_channels, n_groups=8, norm_layer_mode='node',
                 key=None):
        self.norm = norm
        self.in_channels = in_channels
        self.n_groups = n_groups
        self.norm_layer_mode = norm_layer_mode
        key = jax.random.PRNGKey(42) if key is None else key

        C = in_channels
        if norm in ('batch', 'layer'):
            # TODO(synk): BatchNorm eval-mode running statistics not implemented
            # (training-mode batch stats only, as PyG defaults at init).
            self.weight = jnp.ones((1, C), jnp.float32)
            self.bias = jnp.zeros((1, C), jnp.float32)
        elif norm == 'group':
            # DiffGroupNorm: Linear(in_channels, groups, bias=False), lamda=0.01.
            # TODO(synk): inner BatchNorm1d affine params stay at default (w=1, b=0).
            self.lamda = 0.01
            lw = jax.random.normal(key, (n_groups, C), jnp.float32) * (2.0 / C) ** 0.5
            self.lin_weight_T = lw.T                          # [C, G]
        elif norm == 'graph':
            self.weight = jnp.ones((1, C), jnp.float32)
            self.bias = jnp.zeros((1, C), jnp.float32)
            self.mean_scale = jnp.ones((1, C), jnp.float32)
        elif norm in ('none', None):
            pass
        else:
            raise NotImplementedError(norm)

        if norm == 'layer' and norm_layer_mode != 'node':
            # TODO(synk): PyG LayerNorm(mode='graph') not implemented.
            raise NotImplementedError("LayerNorm mode='graph' not implemented")

    # ------------------------------------------------------------------
    def __call__(self, x, batch=None, batch_size=None, tile_rows=None,
                 use_fused=None):
        if self.norm in ('none', None):
            return x

        N, C = x.shape
        fits = N * C * 4 <= _FUSED_BYTES
        fused = fits if use_fused is None else (bool(use_fused) and fits)

        tm = _choose_tm(N, C, x.dtype.itemsize, tile_rows)
        grid = (pl.cdiv(N, tm),)

        if self.norm == 'layer':
            return pl.pallas_call(
                _layer_norm_kernel,
                out_shape=jax.ShapeDtypeStruct((N, C), x.dtype),
                grid=grid,
                in_specs=[_row_block(tm, C), _const_block((1, C)),
                          _const_block((1, C))],
                out_specs=_row_block(tm, C),
                compiler_params=_cparams("parallel"),
            )(x, self.weight, self.bias)

        if self.norm == 'batch':
            if fused:
                return pl.pallas_call(
                    _batch_fused_kernel,
                    out_shape=jax.ShapeDtypeStruct((N, C), x.dtype),
                    compiler_params=_NOGRID,
                )(x, self.weight, self.bias)
            stats = pl.pallas_call(
                functools.partial(_batch_stats_kernel, n_total=N, block_rows=tm),
                out_shape=jax.ShapeDtypeStruct((2, C), jnp.float32),
                grid=grid,
                in_specs=[_row_block(tm, C)],
                out_specs=_const_block((2, C)),
                compiler_params=_cparams("arbitrary"),
            )(x)
            return pl.pallas_call(
                _batch_apply_kernel,
                out_shape=jax.ShapeDtypeStruct((N, C), x.dtype),
                grid=grid,
                in_specs=[_row_block(tm, C), _const_block((2, C)),
                          _const_block((1, C)), _const_block((1, C))],
                out_specs=_row_block(tm, C),
                compiler_params=_cparams("parallel"),
            )(x, stats, self.weight, self.bias)

        if self.norm == 'group':
            G = self.n_groups
            if fused:
                return pl.pallas_call(
                    functools.partial(_group_fused_kernel, lamda=self.lamda),
                    out_shape=jax.ShapeDtypeStruct((N, C), x.dtype),
                    compiler_params=_NOGRID,
                )(x, self.lin_weight_T)
            inv, off = pl.pallas_call(
                functools.partial(_group_stats_kernel, n_total=N, block_rows=tm),
                out_shape=(jax.ShapeDtypeStruct((G, C), jnp.float32),
                           jax.ShapeDtypeStruct((1, C), jnp.float32)),
                grid=grid,
                in_specs=[_row_block(tm, C), _const_block((C, G))],
                out_specs=(_const_block((G, C)), _const_block((1, C))),
                scratch_shapes=[pltpu.VMEM((G, C), jnp.float32),
                                pltpu.VMEM((G, C), jnp.float32)],
                compiler_params=_cparams("arbitrary"),
            )(x, self.lin_weight_T)
            return pl.pallas_call(
                functools.partial(_group_apply_kernel, lamda=self.lamda),
                out_shape=jax.ShapeDtypeStruct((N, C), x.dtype),
                grid=grid,
                in_specs=[_row_block(tm, C), _const_block((C, G)),
                          _const_block((G, C)), _const_block((1, C))],
                out_specs=_row_block(tm, C),
                compiler_params=_cparams("parallel"),
            )(x, self.lin_weight_T, inv, off)

        if self.norm == 'graph':
            if batch is None:
                batch = jnp.zeros((N,), jnp.int32)
                batch_size = 1
            if batch_size is None:
                # Host sync + recompile per distinct batch_size; pass batch_size
                # explicitly in real use to keep the pipeline clean.
                batch_size = int(jax.device_get(jnp.max(batch))) + 1
            B = int(batch_size)
            bid = batch.astype(jnp.int32).reshape(N, 1)

            if fused:
                return pl.pallas_call(
                    functools.partial(_graph_fused_kernel, num_graphs=B),
                    out_shape=jax.ShapeDtypeStruct((N, C), x.dtype),
                    compiler_params=_NOGRID,
                )(x, bid, self.mean_scale, self.weight, self.bias)

            sums, sqs, cnt = pl.pallas_call(
                functools.partial(_graph_stats_kernel, num_graphs=B,
                                  n_total=N, block_rows=tm),
                out_shape=(jax.ShapeDtypeStruct((B, C), jnp.float32),
                           jax.ShapeDtypeStruct((B, C), jnp.float32),
                           jax.ShapeDtypeStruct((1, B), jnp.float32)),
                grid=grid,
                in_specs=[_row_block(tm, C), _row_block(tm, 1)],
                out_specs=(_const_block((B, C)), _const_block((B, C)),
                           _const_block((1, B))),
                compiler_params=_cparams("arbitrary"),
            )(x, bid)
            return pl.pallas_call(
                functools.partial(_graph_apply_kernel, num_graphs=B),
                out_shape=jax.ShapeDtypeStruct((N, C), x.dtype),
                grid=grid,
                in_specs=[_row_block(tm, C), _row_block(tm, 1),
                          _const_block((B, C)), _const_block((B, C)),
                          _const_block((1, B)), _const_block((1, C)),
                          _const_block((1, C)), _const_block((1, C))],
                out_specs=_row_block(tm, C),
                compiler_params=_cparams("parallel"),
            )(x, bid, sums, sqs, cnt, self.mean_scale, self.weight, self.bias)

        raise NotImplementedError(self.norm)


# ----------------------------------------------------------------------------
if __name__ == "__main__":
    key = jax.random.PRNGKey(0)
    N, C, B, G = 200, 128, 4, 8                # nodes, channels, graphs, groups
    kx, kp = jax.random.split(key)
    x = jax.random.normal(kx, (N, C), dtype=jnp.float32)
    batch = jnp.repeat(jnp.arange(B, dtype=jnp.int32), N // B)   # [200] graph ids

    # ------- pure-JAX references (for sanity) --------------------------------
    def ref_layer(x, w, b):
        m = x.mean(-1, keepdims=True)
        v = ((x - m) ** 2).mean(-1, keepdims=True)
        return (x - m) / jnp.sqrt(v + EPS) * w + b

    def ref_batch(x, w, b):
        m = x.mean(0, keepdims=True)
        v = ((x - m) ** 2).mean(0, keepdims=True)
        return (x - m) / jnp.sqrt(v + EPS) * w + b

    def ref_group(x, wT, lamda):
        s = jax.nn.softmax(x @ wT, axis=-1)
        g = s[:, :, None] * x[:, None, :]
        m = g.mean(0, keepdims=True)
        v = ((g - m) ** 2).mean(0, keepdims=True)
        out = ((g - m) / jnp.sqrt(v + EPS)).sum(1)
        return x + lamda * out

    def ref_graph(x, batch, B, w, b, ms):
        oh = jax.nn.one_hot(batch, B, dtype=x.dtype)          # [N, B]
        cnt = jnp.maximum(oh.sum(0), 1.0)                     # [B]
        mean = (oh.T @ x) / cnt[:, None]
        out = x - (oh @ mean) * ms
        var = (oh.T @ (out * out)) / cnt[:, None]
        std = jnp.sqrt(var + EPS)
        return w * out / (oh @ std) + b

    def check(name, y, ref, tol=5e-3):
        d = float(jnp.max(jnp.abs(y - ref)))
        assert d < tol, f"{name}: max abs diff {d}"

    for norm in ('layer', 'batch', 'group', 'graph', 'none'):
        layer = NormLayer(norm, C, n_groups=G, key=kp)
        if norm == 'layer':
            ref = ref_layer(x, layer.weight, layer.bias)
        elif norm == 'batch':
            ref = ref_batch(x, layer.weight, layer.bias)
        elif norm == 'group':
            ref = ref_group(x, layer.lin_weight_T, layer.lamda)
        elif norm == 'graph':
            ref = ref_graph(x, batch, B, layer.weight, layer.bias,
                            layer.mean_scale)
        else:
            ref = x

        # Exercise both the fused (single VMEM-resident pass) and the tiled
        # (multi-block, masked-reduction) code paths.
        for use_fused, tile_rows in ((True, None), (False, 64)):
            if norm == 'graph':
                y = layer(x, batch=batch, batch_size=B,
                          tile_rows=tile_rows, use_fused=use_fused)
            else:
                y = layer(x, tile_rows=tile_rows, use_fused=use_fused)
            y = jax.block_until_ready(y)
            assert y.shape == (N, C) and y.dtype == x.dtype
            check(f"{norm}/fused={use_fused}", y, ref)

    print("KERNEL_OK")
</pallas_src>

<mosaic_0001>
module attributes {stable_mosaic.version = 11 : i64} {
  func.func @_layer_norm_kernel(%arg0: i32, %arg1: memref<208x128xf32, #tpu.memory_space<vmem>>, %arg2: memref<1x128xf32, #tpu.memory_space<vmem>>, %arg3: memref<1x128xf32, #tpu.memory_space<vmem>>, %arg4: memref<208x128xf32, #tpu.memory_space<vmem>>) attributes {dimension_semantics = [#tpu.dimension_semantics<parallel>], iteration_bounds = array<i64: 1>, scalar_prefetch = 0 : i64, scratch_operands = 0 : i64, tpu.core_type = #tpu.core_type<tc>, window_params = [{transform_indices = @transform_0, window_bounds = array<i64: 208, 128>}, {pipeline_mode = #tpu.pipeline_mode<synchronous>, transform_indices = @transform_1, window_bounds = array<i64: 1, 128>}, {pipeline_mode = #tpu.pipeline_mode<synchronous>, transform_indices = @transform_2, window_bounds = array<i64: 1, 128>}, {transform_indices = @transform_3, window_bounds = array<i64: 208, 128>}]} {
    %c0 = arith.constant 0 : index
    %c0_0 = arith.constant 0 : index
    %0 = vector.load %arg1[%c0, %c0_0] : memref<208x128xf32, #tpu.memory_space<vmem>>, vector<208x128xf32>
    %cst = arith.constant dense<0.000000e+00> : vector<208xf32>
    %1 = vector.multi_reduction <add>, %0, %cst [1] : vector<208x128xf32> to vector<208xf32>
    %2 = vector.shape_cast %1 : vector<208xf32> to vector<208x1xf32>
    %cst_1 = arith.constant 1.280000e+02 : f32
    %3 = vector.broadcast %cst_1 : f32 to vector<208x1xf32>
    %4 = arith.divf %2, %3 : vector<208x1xf32>
    %5 = vector.broadcast %4 : vector<208x1xf32> to vector<208x128xf32>
    %6 = arith.subf %0, %5 : vector<208x128xf32>
    %7 = arith.mulf %6, %6 : vector<208x128xf32>
    %cst_2 = arith.constant dense<0.000000e+00> : vector<208xf32>
    %8 = vector.multi_reduction <add>, %7, %cst_2 [1] : vector<208x128xf32> to vector<208xf32>
    %9 = vector.shape_cast %8 : vector<208xf32> to vector<208x1xf32>
    %cst_3 = arith.constant 1.280000e+02 : f32
    %10 = vector.broadcast %cst_3 : f32 to vector<208x1xf32>
    %11 = arith.divf %9, %10 : vector<208x1xf32>
    %cst_4 = arith.constant 9.99999974E-6 : f32
    %12 = vector.broadcast %cst_4 : f32 to vector<208x1xf32>
    %13 = arith.addf %11, %12 : vector<208x1xf32>
    %14 = math.rsqrt %13 : vector<208x1xf32>
    %15 = vector.broadcast %14 : vector<208x1xf32> to vector<208x128xf32>
    %16 = arith.mulf %6, %15 : vector<208x128xf32>
    %c0_5 = arith.constant 0 : index
    %c0_6 = arith.constant 0 : index
    %17 = vector.load %arg2[%c0_5, %c0_6] : memref<1x128xf32, #tpu.memory_space<vmem>>, vector<1x128xf32>
    %18 = vector.broadcast %17 : vector<1x128xf32> to vector<208x128xf32>
    %19 = arith.mulf %16, %18 : vector<208x128xf32>
    %c0_7 = arith.constant 0 : index
    %c0_8 = arith.constant 0 : index
    %20 = vector.load %arg3[%c0_7, %c0_8] : memref<1x128xf32, #tpu.memory_space<vmem>>, vector<1x128xf32>
    %21 = vector.broadcast %20 : vector<1x128xf32> to vector<208x128xf32>
    %22 = arith.addf %19, %21 : vector<208x128xf32>
    %c0_9 = arith.constant 0 : index
    %c0_10 = arith.constant 0 : index
    %23 = vector.load %arg4[%c0_9, %c0_10] : memref<208x128xf32, #tpu.memory_space<vmem>>, vector<208x128xf32>
    tpu.vector_store %arg4[%c0_9, %c0_10], %22 {strides = array<i32>} : memref<208x128xf32, #tpu.memory_space<vmem>>, vector<208x128xf32>,
    return
  }
  func.func @transform_0(%arg0: i32) -> (i32, i32) {
    %c0_i32 = arith.constant 0 : i32
    %c0_i32_0 = arith.constant 0 : i32
    return %arg0, %c0_i32 : i32, i32
  }
  func.func @transform_1(%arg0: i32) -> (i32, i32) {
    %c0_i32 = arith.constant 0 : i32
    %c0_i32_0 = arith.constant 0 : i32
    %c0_i32_1 = arith.constant 0 : i32
    return %c0_i32, %c0_i32_0 : i32, i32
  }
  func.func @transform_2(%arg0: i32) -> (i32, i32) {
    %c0_i32 = arith.constant 0 : i32
    %c0_i32_0 = arith.constant 0 : i32
    %c0_i32_1 = arith.constant 0 : i32
    return %c0_i32, %c0_i32_0 : i32, i32
  }
  func.func @transform_3(%arg0: i32) -> (i32, i32) {
    %c0_i32 = arith.constant 0 : i32
    %c0_i32_0 = arith.constant 0 : i32
    return %arg0, %c0_i32 : i32, i32
  }
}

</mosaic_0001>

<llo_original>
// kernel: tpu_custom_call.1
$region0: #{tpu_custom_call.1}
  #allocation0 [shape = 'u32[]', space=smem, size = 0x4, offset = 0x4, fixed_abs, tag = 'smem constant byte address 0x4 - core index']
  #allocation1 [shape = 'u32[144,128]{1,0:T(1,128)}', space=vmem, size = 0x12000, scoped, tag = 'internal scratch']
  %s0 = inlined_call_operand.hbm [shape: f32[200,128], index: 0, kind: input, shape index: {}]
  %s1 = inlined_call_operand.vmem [shape: f32[1,128], index: 1, kind: input, shape index: {}]
  %s2 = inlined_call_operand.vmem [shape: f32[1,128], index: 2, kind: input, shape index: {}]
  %s3 = inlined_call_operand.hbm [shape: f32[200,128], index: 3, kind: output, shape index: {}]
  %s4 = sld [smem:[#allocation0]]
  $region26: #{tpu_custom_call.1} parent=0
    _
  %s6 = ssub.s32 1, %s4
  %s7 = scalar_select 0, %s6, %s4
  $region1: #{tpu_custom_call.1} parent=0
    #allocation2 [shape = 'u8[106496]{0}', space=vmem, size = 0x1a000, scoped, tag = 'input window, operand 0, single buffered']
    #allocation3 [shape = 's32[1]{0}', space=sflag, size = 0x4, scoped, tag = 'scoped memory for tpu_custom_call.1']
    #allocation4 [shape = 's32[1]{0}', space=sflag, size = 0x4, scoped, tag = 'scoped memory for tpu_custom_call.1']
    #allocation5 [shape = 'u8[106496]{0}', space=vmem, size = 0x1a000, scoped, tag = 'output window, operand 0, single buffered']
    %8 = vsyncpa [#allocation3], 0
    %9 = vsyncpa [#allocation4], 0
    // Predicated region
    $region2: #{tpu_custom_call.1} parent=1 // pred_check
      _
    $region3: #{tpu_custom_call.1} parent=1 // pred_check_branch
      %11 = sbr.rel (0) target = $region5
    $region4: #{tpu_custom_call.1} parent=1 // pred_region
      %s13 = ssub.s32 3328, 3200
      %14 = vsyncadd [#allocation3], %s13
      %s15 = sshll.u32 [#allocation2], 4
      %s16 = int_to_ptr.vmem [resolvable:$true] %s15
      %21 = dma.hbm_to_vmem [thread:$0]  %s0, 3200, %s16, [#allocation3], 128, 128, 8
    $region5: #{tpu_custom_call.1} parent=1 // pred_fallthru
      _
    // Predicated region
    $region6: #{tpu_custom_call.1} parent=1 // pred_check
      _
    $region7: #{tpu_custom_call.1} parent=1 // pred_check_branch
      %23 = sbr.rel (0) target = $region9
    $region8: #{tpu_custom_call.1} parent=1 // pred_region
      _
    $region9: #{tpu_custom_call.1} parent=1 // pred_fallthru
      _
    // Predicated region
    $region10: #{tpu_custom_call.1} parent=1 // pred_check
      _
    $region11: #{tpu_custom_call.1} parent=1 // pred_check_branch
      %25 = sbr.rel (0) target = $region13
    $region12: #{tpu_custom_call.1} parent=1 // pred_region
      _
    $region13: #{tpu_custom_call.1} parent=1 // pred_fallthru
      _
    // Predicated region
    $region14: #{tpu_custom_call.1} parent=1 // pred_check
      _
    $region15: #{tpu_custom_call.1} parent=1 // pred_check_branch
      %27 = sbr.rel (0) target = $region17
    $region16: #{tpu_custom_call.1} parent=1 // pred_region
      %28 = dma.done [#allocation3], 3328
    $region17: #{tpu_custom_call.1} parent=1 // pred_fallthru
      _
    %v29 = vld [vmem:[#allocation2] sm:$0xff]
    %v30 = vld [vmem:[#allocation2 + $0x8] sm:$0xff]
    %v31 = vld [vmem:[#allocation2 + $0x10] sm:$0xff]
    %v32 = vld [vmem:[#allocation2 + $0x18] sm:$0xff]
    %v33 = vld [vmem:[#allocation2 + $0x20] sm:$0xff]
    %v34 = vld [vmem:[#allocation2 + $0x28] sm:$0xff]
    %v35 = vld [vmem:[#allocation2 + $0x30] sm:$0xff]
    %v36 = vld [vmem:[#allocation2 + $0x38] sm:$0xff]
    %v37 = vld [vmem:[#allocation2 + $0x40] sm:$0xff]
    %v38 = vld [vmem:[#allocation2 + $0x48] sm:$0xff]
    %v39 = vld [vmem:[#allocation2 + $0x50] sm:$0xff]
    %v40 = vld [vmem:[#allocation2 + $0x58] sm:$0xff]
    %v41 = vld [vmem:[#allocation2 + $0x60] sm:$0xff]
    %v42 = vld [vmem:[#allocation2 + $0x68] sm:$0xff]
    %v43 = vld [vmem:[#allocation2 + $0x70] sm:$0xff]
    %v44 = vld [vmem:[#allocation2 + $0x78] sm:$0xff]
    %v45 = vld [vmem:[#allocation2 + $0x80] sm:$0xff]
    %v46 = vld [vmem:[#allocation2 + $0x88] sm:$0xff]
    %v47 = vld [vmem:[#allocation2 + $0x90] sm:$0xff]
    %v48 = vld [vmem:[#allocation2 + $0x98] sm:$0xff]
    %v49 = vld [vmem:[#allocation2 + $0xa0] sm:$0xff]
    %v50 = vld [vmem:[#allocation2 + $0xa8] sm:$0xff]
    %v51 = vld [vmem:[#allocation2 + $0xb0] sm:$0xff]
    %v52 = vld [vmem:[#allocation2 + $0xb8] sm:$0xff]
    %v53 = vld [vmem:[#allocation2 + $0xc0] sm:$0xff]
    %v54 = vld [vmem:[#allocation2 + $0xc8] sm:$0xff]
    %55 = vadd.xlane.f32.xlu0 %v29
    %v56 = vpop.xlane.xlu0 %55
    %57 = vadd.xlane.f32.xlu0 %v30
    %v58 = vpop.xlane.xlu0 %57
    %59 = vadd.xlane.f32.xlu0 %v31
    %v60 = vpop.xlane.xlu0 %59
    %61 = vadd.xlane.f32.xlu0 %v32
    %v62 = vpop.xlane.xlu0 %61
    %63 = vadd.xlane.f32.xlu0 %v33
    %v64 = vpop.xlane.xlu0 %63
    %65 = vadd.xlane.f32.xlu0 %v34
    %v66 = vpop.xlane.xlu0 %65
    %67 = vadd.xlane.f32.xlu0 %v35
    %v68 = vpop.xlane.xlu0 %67
    %69 = vadd.xlane.f32.xlu0 %v36
    %v70 = vpop.xlane.xlu0 %69
    %71 = vadd.xlane.f32.xlu0 %v37
    %v72 = vpop.xlane.xlu0 %71
    %73 = vadd.xlane.f32.xlu0 %v38
    %v74 = vpop.xlane.xlu0 %73
    %75 = vadd.xlane.f32.xlu0 %v39
    %v76 = vpop.xlane.xlu0 %75
    %77 = vadd.xlane.f32.xlu0 %v40
    %v78 = vpop.xlane.xlu0 %77
    %79 = vadd.xlane.f32.xlu0 %v41
    %v80 = vpop.xlane.xlu0 %79
    %81 = vadd.xlane.f32.xlu0 %v42
    %v82 = vpop.xlane.xlu0 %81
    %83 = vadd.xlane.f32.xlu0 %v43
    %v84 = vpop.xlane.xlu0 %83
    %85 = vadd.xlane.f32.xlu0 %v44
    %v86 = vpop.xlane.xlu0 %85
    %87 = vadd.xlane.f32.xlu0 %v45
    %v88 = vpop.xlane.xlu0 %87
    %89 = vadd.xlane.f32.xlu0 %v46
    %v90 = vpop.xlane.xlu0 %89
    %91 = vadd.xlane.f32.xlu0 %v47
    %v92 = vpop.xlane.xlu0 %91
    %93 = vadd.xlane.f32.xlu0 %v48
    %v94 = vpop.xlane.xlu0 %93
    %95 = vadd.xlane.f32.xlu0 %v49
    %v96 = vpop.xlane.xlu0 %95
    %97 = vadd.xlane.f32.xlu0 %v50
    %v98 = vpop.xlane.xlu0 %97
    %99 = vadd.xlane.f32.xlu0 %v51
    %v100 = vpop.xlane.xlu0 %99
    %101 = vadd.xlane.f32.xlu0 %v52
    %v102 = vpop.xlane.xlu0 %101
    %103 = vadd.xlane.f32.xlu0 %v53
    %v104 = vpop.xlane.xlu0 %103
    %105 = vadd.xlane.f32.xlu0 %v54
    %v106 = vpop.xlane.xlu0 %105
    %v107 = vrcp.pop 128.0
    %v108 = vmul.f32 %v56, %v107
    %v109 = vmul.f32 %v58, %v107
    %v110 = vmul.f32 %v60, %v107
    %v111 = vmul.f32 %v62, %v107
    %v112 = vmul.f32 %v64, %v107
    %v113 = vmul.f32 %v66, %v107
    %v114 = vmul.f32 %v68, %v107
    %v115 = vmul.f32 %v70, %v107
    %v116 = vmul.f32 %v72, %v107
    %v117 = vmul.f32 %v74, %v107
    %v118 = vmul.f32 %v76, %v107
    %v119 = vmul.f32 %v78, %v107
    %v120 = vmul.f32 %v80, %v107
    %v121 = vmul.f32 %v82, %v107
    %v122 = vmul.f32 %v84, %v107
    %v123 = vmul.f32 %v86, %v107
    %v124 = vmul.f32 %v88, %v107
    %v125 = vmul.f32 %v90, %v107
    %v126 = vmul.f32 %v92, %v107
    %v127 = vmul.f32 %v94, %v107
    %v128 = vmul.f32 %v96, %v107
    %v129 = vmul.f32 %v98, %v107
    %v130 = vmul.f32 %v100, %v107
    %v131 = vmul.f32 %v102, %v107
    %v132 = vmul.f32 %v104, %v107
    %v133 = vmul.f32 %v106, %v107
    %v134 = vsub.f32 %v29, %v108
    %v135 = vsub.f32 %v30, %v109
    %v136 = vsub.f32 %v31, %v110
    %v137 = vsub.f32 %v32, %v111
    %v138 = vsub.f32 %v33, %v112
    %v139 = vsub.f32 %v34, %v113
    %v140 = vsub.f32 %v35, %v114
    %v141 = vsub.f32 %v36, %v115
    %v142 = vsub.f32 %v37, %v116
    %v143 = vsub.f32 %v38, %v117
    %v144 = vsub.f32 %v39, %v118
    %v145 = vsub.f32 %v40, %v119
    %v146 = vsub.f32 %v41, %v120
    %v147 = vsub.f32 %v42, %v121
    %v148 = vsub.f32 %v43, %v122
    %v149 = vsub.f32 %v44, %v123
    %v150 = vsub.f32 %v45, %v124
    %v151 = vsub.f32 %v46, %v125
    %v152 = vsub.f32 %v47, %v126
    %v153 = vsub.f32 %v48, %v127
    %v154 = vsub.f32 %v49, %v128
    %v155 = vsub.f32 %v50, %v129
    %v156 = vsub.f32 %v51, %v130
    %v157 = vsub.f32 %v52, %v131
    %v158 = vsub.f32 %v53, %v132
    %v159 = vsub.f32 %v54, %v133
    %v160 = vmul.f32 %v134, %v134
    %v161 = vmul.f32 %v135, %v135
    %v162 = vmul.f32 %v136, %v136
    %v163 = vmul.f32 %v137, %v137
    %v164 = vmul.f32 %v138, %v138
    %v165 = vmul.f32 %v139, %v139
    %v166 = vmul.f32 %v140, %v140
    %v167 = vmul.f32 %v141, %v141
    %v168 = vmul.f32 %v142, %v142
    %v169 = vmul.f32 %v143, %v143
    %v170 = vmul.f32 %v144, %v144
    %v171 = vmul.f32 %v145, %v145
    %v172 = vmul.f32 %v146, %v146
    %v173 = vmul.f32 %v147, %v147
    %v174 = vmul.f32 %v148, %v148
    %v175 = vmul.f32 %v149, %v149
    %v176 = vmul.f32 %v150, %v150
    %v177 = vmul.f32 %v151, %v151
    %v178 = vmul.f32 %v152, %v152
    %v179 = vmul.f32 %v153, %v153
    %v180 = vmul.f32 %v154, %v154
    %v181 = vmul.f32 %v155, %v155
    %v182 = vmul.f32 %v156, %v156
    %v183 = vmul.f32 %v157, %v157
    %v184 = vmul.f32 %v158, %v158
    %v185 = vmul.f32 %v159, %v159
    %186 = vadd.xlane.f32.xlu0 %v160
    %v187 = vpop.xlane.xlu0 %186
    %188 = vadd.xlane.f32.xlu0 %v161
    %v189 = vpop.xlane.xlu0 %188
    %190 = vadd.xlane.f32.xlu0 %v162
    %v191 = vpop.xlane.xlu0 %190
    %192 = vadd.xlane.f32.xlu0 %v163
    %v193 = vpop.xlane.xlu0 %192
    %194 = vadd.xlane.f32.xlu0 %v164
    %v195 = vpop.xlane.xlu0 %194
    %196 = vadd.xlane.f32.xlu0 %v165
    %v197 = vpop.xlane.xlu0 %196
    %198 = vadd.xlane.f32.xlu0 %v166
    %v199 = vpop.xlane.xlu0 %198
    %200 = vadd.xlane.f32.xlu0 %v167
    %v201 = vpop.xlane.xlu0 %200
    %202 = vadd.xlane.f32.xlu0 %v168
    %v203 = vpop.xlane.xlu0 %202
    %204 = vadd.xlane.f32.xlu0 %v169
    %v205 = vpop.xlane.xlu0 %204
    %206 = vadd.xlane.f32.xlu0 %v170
    %v207 = vpop.xlane.xlu0 %206
    %208 = vadd.xlane.f32.xlu0 %v171
    %v209 = vpop.xlane.xlu0 %208
    %210 = vadd.xlane.f32.xlu0 %v172
    %v211 = vpop.xlane.xlu0 %210
    %212 = vadd.xlane.f32.xlu0 %v173
    %v213 = vpop.xlane.xlu0 %212
    %214 = vadd.xlane.f32.xlu0 %v174
    %v215 = vpop.xlane.xlu0 %214
    %216 = vadd.xlane.f32.xlu0 %v175
    %v217 = vpop.xlane.xlu0 %216
    %218 = vadd.xlane.f32.xlu0 %v176
    %v219 = vpop.xlane.xlu0 %218
    %220 = vadd.xlane.f32.xlu0 %v177
    %v221 = vpop.xlane.xlu0 %220
    %222 = vadd.xlane.f32.xlu0 %v178
    %v223 = vpop.xlane.xlu0 %222
    %224 = vadd.xlane.f32.xlu0 %v179
    %v225 = vpop.xlane.xlu0 %224
    %226 = vadd.xlane.f32.xlu0 %v180
    %v227 = vpop.xlane.xlu0 %226
    %228 = vadd.xlane.f32.xlu0 %v181
    %v229 = vpop.xlane.xlu0 %228
    %230 = vadd.xlane.f32.xlu0 %v182
    %v231 = vpop.xlane.xlu0 %230
    %232 = vadd.xlane.f32.xlu0 %v183
    %v233 = vpop.xlane.xlu0 %232
    %234 = vadd.xlane.f32.xlu0 %v184
    %v235 = vpop.xlane.xlu0 %234
    %236 = vadd.xlane.f32.xlu0 %v185
    %v237 = vpop.xlane.xlu0 %236
    %v238 = vmul.f32 %v187, %v107
    %v239 = vmul.f32 %v189, %v107
    %v240 = vmul.f32 %v191, %v107
    %v241 = vmul.f32 %v193, %v107
    %v242 = vmul.f32 %v195, %v107
    %v243 = vmul.f32 %v197, %v107
    %v244 = vmul.f32 %v199, %v107
    %v245 = vmul.f32 %v201, %v107
    %v246 = vmul.f32 %v203, %v107
    %v247 = vmul.f32 %v205, %v107
    %v248 = vmul.f32 %v207, %v107
    %v249 = vmul.f32 %v209, %v107
    %v250 = vmul.f32 %v211, %v107
    %v251 = vmul.f32 %v213, %v107
    %v252 = vmul.f32 %v215, %v107
    %v253 = vmul.f32 %v217, %v107
    %v254 = vmul.f32 %v219, %v107
    %v255 = vmul.f32 %v221, %v107
    %v256 = vmul.f32 %v223, %v107
    %v257 = vmul.f32 %v225, %v107
    %v258 = vmul.f32 %v227, %v107
    %v259 = vmul.f32 %v229, %v107
    %v260 = vmul.f32 %v231, %v107
    %v261 = vmul.f32 %v233, %v107
    %v262 = vmul.f32 %v235, %v107
    %v263 = vmul.f32 %v237, %v107
    %v264 = vadd.f32 %v238, 1e-05
    %v265 = vadd.f32 %v239, 1e-05
    %v266 = vadd.f32 %v240, 1e-05
    %v267 = vadd.f32 %v241, 1e-05
    %v268 = vadd.f32 %v242, 1e-05
    %v269 = vadd.f32 %v243, 1e-05
    %v270 = vadd.f32 %v244, 1e-05
    %v271 = vadd.f32 %v245, 1e-05
    %v272 = vadd.f32 %v246, 1e-05
    %v273 = vadd.f32 %v247, 1e-05
    %v274 = vadd.f32 %v248, 1e-05
    %v275 = vadd.f32 %v249, 1e-05
    %v276 = vadd.f32 %v250, 1e-05
    %v277 = vadd.f32 %v251, 1e-05
    %v278 = vadd.f32 %v252, 1e-05
    %v279 = vadd.f32 %v253, 1e-05
    %v280 = vadd.f32 %v254, 1e-05
    %v281 = vadd.f32 %v255, 1e-05
    %v282 = vadd.f32 %v256, 1e-05
    %v283 = vadd.f32 %v257, 1e-05
    %v284 = vadd.f32 %v258, 1e-05
    %v285 = vadd.f32 %v259, 1e-05
    %v286 = vadd.f32 %v260, 1e-05
    %v287 = vadd.f32 %v261, 1e-05
    %v288 = vadd.f32 %v262, 1e-05
    %v289 = vadd.f32 %v263, 1e-05
    %v290 = vrsqrt.pop %v264
    %v291 = vrsqrt.pop %v265
    %v292 = vrsqrt.pop %v266
    %v293 = vrsqrt.pop %v267
    %v294 = vrsqrt.pop %v268
    %v295 = vrsqrt.pop %v269
    %v296 = vrsqrt.pop %v270
    %v297 = vrsqrt.pop %v271
    %v298 = vrsqrt.pop %v272
    %v299 = vrsqrt.pop %v273
    %v300 = vrsqrt.pop %v274
    %v301 = vrsqrt.pop %v275
    %v302 = vrsqrt.pop %v276
    %v303 = vrsqrt.pop %v277
    %v304 = vrsqrt.pop %v278
    %v305 = vrsqrt.pop %v279
    %v306 = vrsqrt.pop %v280
    %v307 = vrsqrt.pop %v281
    %v308 = vrsqrt.pop %v282
    %v309 = vrsqrt.pop %v283
    %v310 = vrsqrt.pop %v284
    %v311 = vrsqrt.pop %v285
    %v312 = vrsqrt.pop %v286
    %v313 = vrsqrt.pop %v287
    %v314 = vrsqrt.pop %v288
    %v315 = vrsqrt.pop %v289
    %v316 = vmul.f32 %v134, %v290
    %v317 = vmul.f32 %v135, %v291
    %v318 = vmul.f32 %v136, %v292
    %v319 = vmul.f32 %v137, %v293
    %v320 = vmul.f32 %v138, %v294
    %v321 = vmul.f32 %v139, %v295
    %v322 = vmul.f32 %v140, %v296
    %v323 = vmul.f32 %v141, %v297
    %v324 = vmul.f32 %v142, %v298
    %v325 = vmul.f32 %v143, %v299
    %v326 = vmul.f32 %v144, %v300
    %v327 = vmul.f32 %v145, %v301
    %v328 = vmul.f32 %v146, %v302
    %v329 = vmul.f32 %v147, %v303
    %v330 = vmul.f32 %v148, %v304
    %v331 = vmul.f32 %v149, %v305
    %v332 = vmul.f32 %v150, %v306
    %v333 = vmul.f32 %v151, %v307
    %v334 = vmul.f32 %v152, %v308
    %v335 = vmul.f32 %v153, %v309
    %v336 = vmul.f32 %v154, %v310
    %v337 = vmul.f32 %v155, %v311
    %v338 = vmul.f32 %v156, %v312
    %v339 = vmul.f32 %v157, %v313
    %v340 = vmul.f32 %v158, %v314
    %v341 = vmul.f32 %v159, %v315
    %v342 = vld [vmem:[%s1] sm:$0x1]
    %v344 = vlaneseq
    %v345 = vshrl.u32 %v344, 7
    %v346 = vsub.s32 0, %v345
    %v347 = vrot.slane %v342, %v346
    %v349 = vmul.f32 %v316, %v347
    %v350 = vmul.f32 %v317, %v347
    %v351 = vmul.f32 %v318, %v347
    %v352 = vmul.f32 %v319, %v347
    %v353 = vmul.f32 %v320, %v347
    %v354 = vmul.f32 %v321, %v347
    %v355 = vmul.f32 %v322, %v347
    %v356 = vmul.f32 %v323, %v347
    %v357 = vmul.f32 %v324, %v347
    %v358 = vmul.f32 %v325, %v347
    %v359 = vmul.f32 %v326, %v347
    %v360 = vmul.f32 %v327, %v347
    %v361 = vmul.f32 %v328, %v347
    %v362 = vmul.f32 %v329, %v347
    %v363 = vmul.f32 %v330, %v347
    %v364 = vmul.f32 %v331, %v347
    %v365 = vmul.f32 %v332, %v347
    %v366 = vmul.f32 %v333, %v347
    %v367 = vmul.f32 %v334, %v347
    %v368 = vmul.f32 %v335, %v347
    %v369 = vmul.f32 %v336, %v347
    %v370 = vmul.f32 %v337, %v347
    %v371 = vmul.f32 %v338, %v347
    %v372 = vmul.f32 %v339, %v347
    %v373 = vmul.f32 %v340, %v347
    %v374 = vmul.f32 %v341, %v347
    %v375 = vld [vmem:[%s2] sm:$0x1]
    %v377 = vlaneseq
    %v378 = vshrl.u32 %v377, 7
    %v379 = vsub.s32 0, %v378
    %v380 = vrot.slane %v375, %v379
    %v382 = vadd.f32 %v349, %v380
    %v383 = vadd.f32 %v350, %v380
    %v384 = vadd.f32 %v351, %v380
    %v385 = vadd.f32 %v352, %v380
    %v386 = vadd.f32 %v353, %v380
    %v387 = vadd.f32 %v354, %v380
    %v388 = vadd.f32 %v355, %v380
    %v389 = vadd.f32 %v356, %v380
    %v390 = vadd.f32 %v357, %v380
    %v391 = vadd.f32 %v358, %v380
    %v392 = vadd.f32 %v359, %v380
    %v393 = vadd.f32 %v360, %v380
    %v394 = vadd.f32 %v361, %v380
    %v395 = vadd.f32 %v362, %v380
    %v396 = vadd.f32 %v363, %v380
    %v397 = vadd.f32 %v364, %v380
    %v398 = vadd.f32 %v365, %v380
    %v399 = vadd.f32 %v366, %v380
    %v400 = vadd.f32 %v367, %v380
    %v401 = vadd.f32 %v368, %v380
    %v402 = vadd.f32 %v369, %v380
    %v403 = vadd.f32 %v370, %v380
    %v404 = vadd.f32 %v371, %v380
    %v405 = vadd.f32 %v372, %v380
    %v406 = vadd.f32 %v373, %v380
    %v407 = vadd.f32 %v374, %v380
    %408 = vst [vmem:[#allocation5] sm:$0xff] %v382
    %409 = vst [vmem:[#allocation5 + $0x8] sm:$0xff] %v383
    %410 = vst [vmem:[#allocation5 + $0x10] sm:$0xff] %v384
    %411 = vst [vmem:[#allocation5 + $0x18] sm:$0xff] %v385
    %412 = vst [vmem:[#allocation5 + $0x20] sm:$0xff] %v386
    %413 = vst [vmem:[#allocation5 + $0x28] sm:$0xff] %v387
    %414 = vst [vmem:[#allocation5 + $0x30] sm:$0xff] %v388
    %415 = vst [vmem:[#allocation5 + $0x38] sm:$0xff] %v389
    %416 = vst [vmem:[#allocation5 + $0x40] sm:$0xff] %v390
    %417 = vst [vmem:[#allocation5 + $0x48] sm:$0xff] %v391
    %418 = vst [vmem:[#allocation5 + $0x50] sm:$0xff] %v392
    %419 = vst [vmem:[#allocation5 + $0x58] sm:$0xff] %v393
    %420 = vst [vmem:[#allocation5 + $0x60] sm:$0xff] %v394
    %421 = vst [vmem:[#allocation5 + $0x68] sm:$0xff] %v395
    %422 = vst [vmem:[#allocation5 + $0x70] sm:$0xff] %v396
    %423 = vst [vmem:[#allocation5 + $0x78] sm:$0xff] %v397
    %424 = vst [vmem:[#allocation5 + $0x80] sm:$0xff] %v398
    %425 = vst [vmem:[#allocation5 + $0x88] sm:$0xff] %v399
    %426 = vst [vmem:[#allocation5 + $0x90] sm:$0xff] %v400
    %427 = vst [vmem:[#allocation5 + $0x98] sm:$0xff] %v401
    %428 = vst [vmem:[#allocation5 + $0xa0] sm:$0xff] %v402
    %429 = vst [vmem:[#allocation5 + $0xa8] sm:$0xff] %v403
    %430 = vst [vmem:[#allocation5 + $0xb0] sm:$0xff] %v404
    %431 = vst [vmem:[#allocation5 + $0xb8] sm:$0xff] %v405
    %432 = vst [vmem:[#allocation5 + $0xc0] sm:$0xff] %v406
    %433 = vst [vmem:[#allocation5 + $0xc8] sm:$0xff] %v407
    // Predicated region
    $region18: #{tpu_custom_call.1} parent=1 // pred_check
      _
    $region19: #{tpu_custom_call.1} parent=1 // pred_check_branch
      %435 = sbr.rel (0) target = $region21
    $region20: #{tpu_custom_call.1} parent=1 // pred_region
      %s437 = ssub.s32 3328, 3200
      %438 = vsyncadd [#allocation4], %s437
      %s439 = sshll.u32 [#allocation5], 4
      %s440 = int_to_ptr.vmem [resolvable:$true] %s439
      %445 = dma.vmem_to_hbm [thread:$0]  %s440, 3200, %s3, [#allocation4], 128, 128, 8
    $region21: #{tpu_custom_call.1} parent=1 // pred_fallthru
      _
    // Predicated region
    $region22: #{tpu_custom_call.1} parent=1 // pred_check
      _
    $region23: #{tpu_custom_call.1} parent=1 // pred_check_branch
      %447 = sbr.rel (0) target = $region25
    $region24: #{tpu_custom_call.1} parent=1 // pred_region
      %448 = dma.done [#allocation4], 3328
    $region25: #{tpu_custom_call.1} parent=1 // pred_fallthru
      _
    %449 = vsyncpa [#allocation3], 1
    %450 = vsyncpa [#allocation4], 1

</llo_original>
